<compile_context>
chip_gen: v7x
topology: tpu7x:2x2x1
jax: 0.10.0
libtpu: 0.0.40
codegen_flags: <defaults>
</compile_context>

<pallas_src>
import functools

import jax
import jax.numpy as jnp
from jax.experimental import pallas as pl
from jax.experimental.pallas import tpu as pltpu

NEG_SLOPE = 0.2
BN_EPS = 1e-5


def _leaky(y):
    return jnp.where(y > 0, y, NEG_SLOPE * y)


def _ru(x, m):
    return ((x + m - 1) // m) * m


def _build_patches(xbuf_ref, pat_ref, kpad, H, W, off, mask_l, mask_r):
    """Fill pat_ref (9*kpad, H*W) with the 9 shifted taps of the line buffer.

    xbuf_ref is (kpad, lbuf): the flattened image (channels, H*W) sits at lane
    offset `off`; everything else is zero.  A (dy, dx) tap is then the pure
    lane slice starting at off + dy*W + dx.  Row over/underflow reads the zero
    pad; only the column wrap-around of dx = +/-1 taps needs masking.
    """
    HW = H * W
    t = 0
    for dy in (-1, 0, 1):
        for dx in (-1, 0, 1):
            start = off + dy * W + dx
            tap = xbuf_ref[:, start:start + HW]
            if dx == -1:
                tap = jnp.where(mask_l, tap, 0.0)
            elif dx == 1:
                tap = jnp.where(mask_r, tap, 0.0)
            pat_ref[t * kpad:(t + 1) * kpad, :] = tap
            t += 1


def _resblock_kernel(x_ref, w1_ref, w2_ref, b1_ref, b2_ref, out_ref,
                     xbuf1, pat1, xbuf2, pat2,
                     *, H, W, C, hidden, kpad1, kpad2, off):
    HW = H * W
    col = jax.lax.broadcasted_iota(jnp.int32, (1, HW), 1) % W
    mask_l = col != 0          # valid lanes for a dx = -1 tap
    mask_r = col != (W - 1)    # valid lanes for a dx = +1 tap

    x2d = x_ref[0].astype(jnp.float32)                        # (C, H*W)

    # ---- stage 1: conv1 (3x3, single im2col matmul) + folded BN1 + LeakyReLU
    xbuf1[...] = jnp.zeros_like(xbuf1)
    xbuf1[0:C, off:off + HW] = x2d
    _build_patches(xbuf1, pat1, kpad1, H, W, off, mask_l, mask_r)
    h = jnp.dot(w1_ref[...], pat1[...], preferred_element_type=jnp.float32)
    h = _leaky(h + b1_ref[...])                               # (hidden, H*W)

    # ---- stage 2: conv2 + folded BN2 + residual + LeakyReLU (h stays in VMEM)
    xbuf2[...] = jnp.zeros_like(xbuf2)
    xbuf2[0:hidden, off:off + HW] = h
    _build_patches(xbuf2, pat2, kpad2, H, W, off, mask_l, mask_r)
    y = jnp.dot(w2_ref[...], pat2[...], preferred_element_type=jnp.float32)
    y = _leaky(y + b2_ref[...] + x2d)                         # (C, H*W)
    out_ref[0] = y.astype(out_ref.dtype)


def _fold_bn(g, b, rm, rv):
    scale = g / jnp.sqrt(rv + BN_EPS)
    bias = b - rm * scale
    return scale, bias


def _make_kmat(w_oihw, kpad):
    """OIHW (O, I, 3, 3) -> (O, 9*kpad); column index t*kpad + i, t = kh*3+kw,
    with the input-channel dim zero-padded to kpad (sublane alignment)."""
    O, I, KH, KW = w_oihw.shape
    w = jnp.transpose(w_oihw, (2, 3, 1, 0))                   # (KH, KW, I, O)
    w = jnp.pad(w, ((0, 0), (0, 0), (0, kpad - I), (0, 0)))   # (KH, KW, kpad, O)
    w = w.reshape(KH * KW * kpad, O)
    return jnp.transpose(w, (1, 0))                           # (O, 9*kpad)


@jax.jit
def res_block_forward(x_nchw, params):
    N, C, H, W = x_nchw.shape
    hidden = params["w1_oihw"].shape[0]
    HW = H * W
    kpad1 = _ru(C, 8)
    kpad2 = _ru(hidden, 8)
    off = _ru(W + 1, 128)                   # lane offset of the image in the line buffer
    lbuf = off + _ru(HW + W + 1, 128)       # line-buffer width (covers both halos)

    # Fold eval-mode BatchNorm: scale goes into the weights, bias stays.
    s1, b1 = _fold_bn(params["g1"], params["b1"], params["rm1"], params["rv1"])
    s2, b2 = _fold_bn(params["g2"], params["b2"], params["rm2"], params["rv2"])
    w1m = (_make_kmat(params["w1_oihw"], kpad1) * s1[:, None]).astype(jnp.float32)
    w2m = (_make_kmat(params["w2_oihw"], kpad2) * s2[:, None]).astype(jnp.float32)
    b1c = b1.reshape(hidden, 1).astype(jnp.float32)
    b2c = b2.reshape(C, 1).astype(jnp.float32)

    x_flat = x_nchw.reshape(N, C, HW)       # free reshape (NCHW is row-major)

    kernel = functools.partial(_resblock_kernel, H=H, W=W, C=C, hidden=hidden,
                               kpad1=kpad1, kpad2=kpad2, off=off)

    out_flat = pl.pallas_call(
        kernel,
        out_shape=jax.ShapeDtypeStruct((N, C, HW), x_nchw.dtype),
        grid=(N,),
        in_specs=[
            pl.BlockSpec((1, C, HW), lambda n: (n, 0, 0)),          # x, lane-dense
            pl.BlockSpec((hidden, 9 * kpad1), lambda n: (0, 0)),    # w1 (scale folded)
            pl.BlockSpec((C, 9 * kpad2), lambda n: (0, 0)),         # w2 (scale folded)
            pl.BlockSpec((hidden, 1), lambda n: (0, 0)),            # bn1 bias
            pl.BlockSpec((C, 1), lambda n: (0, 0)),                 # bn2 bias
        ],
        out_specs=pl.BlockSpec((1, C, HW), lambda n: (n, 0, 0)),    # lane-dense store
        scratch_shapes=[
            pltpu.VMEM((kpad1, lbuf), jnp.float32),   # line buffer, stage 1
            pltpu.VMEM((9 * kpad1, HW), jnp.float32),  # im2col patches, stage 1
            pltpu.VMEM((kpad2, lbuf), jnp.float32),   # line buffer, stage 2
            pltpu.VMEM((9 * kpad2, HW), jnp.float32),  # im2col patches, stage 2
        ],
        compiler_params=pltpu.CompilerParams(
            dimension_semantics=("parallel",),
            vmem_limit_bytes=32 * 1024 * 1024,
        ),
    )(x_flat, w1m, w2m, b1c, b2c)
    return out_flat.reshape(N, C, H, W)


def init_params(key, channels, hidden_channels):
    ks = jax.random.split(key, 10)
    p = {}
    # conv weights (PyTorch OIHW layout), small deterministic values
    p["w1_oihw"] = 0.1 * jax.random.normal(ks[0], (hidden_channels, channels, 3, 3), jnp.float32)
    p["w2_oihw"] = 0.1 * jax.random.normal(ks[1], (channels, hidden_channels, 3, 3), jnp.float32)
    # BatchNorm parameters + running statistics (eval mode)
    p["g1"] = jax.random.uniform(ks[2], (hidden_channels,), jnp.float32, 0.5, 1.5)
    p["b1"] = 0.1 * jax.random.normal(ks[3], (hidden_channels,), jnp.float32)
    p["rm1"] = 0.1 * jax.random.normal(ks[4], (hidden_channels,), jnp.float32)
    p["rv1"] = jax.random.uniform(ks[5], (hidden_channels,), jnp.float32, 0.5, 1.5)
    p["g2"] = jax.random.uniform(ks[6], (channels,), jnp.float32, 0.5, 1.5)
    p["b2"] = 0.1 * jax.random.normal(ks[7], (channels,), jnp.float32)
    p["rm2"] = 0.1 * jax.random.normal(ks[8], (channels,), jnp.float32)
    p["rv2"] = jax.random.uniform(ks[9], (channels,), jnp.float32, 0.5, 1.5)
    return p


# -------------------- pure-JAX reference (for verification) --------------------
def _reference_forward(x_nchw, params):
    def conv(x, w):
        return jax.lax.conv_general_dilated(
            x, w, (1, 1), "SAME", dimension_numbers=("NCHW", "OIHW", "NCHW"))

    def bn(x, g, b, rm, rv):
        inv = 1.0 / jnp.sqrt(rv + BN_EPS)
        return (x - rm[None, :, None, None]) * inv[None, :, None, None] * \
            g[None, :, None, None] + b[None, :, None, None]

    h = _leaky(bn(conv(x_nchw, params["w1_oihw"]),
                  params["g1"], params["b1"], params["rm1"], params["rv1"]))
    return _leaky(x_nchw + bn(conv(h, params["w2_oihw"]),
                              params["g2"], params["b2"], params["rm2"], params["rv2"]))


if __name__ == "__main__":
    key = jax.random.PRNGKey(0)
    k_x, k_p = jax.random.split(key)

    N, C, H, W = 2, 4, 16, 16
    HIDDEN = 8

    x = jax.random.normal(k_x, (N, C, H, W), jnp.float32)
    params = init_params(k_p, C, HIDDEN)

    out = res_block_forward(x, params)
    out = jax.block_until_ready(out)

    ref = _reference_forward(x, params)
    assert out.shape == (N, C, H, W)
    assert jnp.allclose(out, ref, atol=1e-4, rtol=1e-4), "mismatch vs reference"

    print("KERNEL_OK")
</pallas_src>

<mosaic_0001>
module attributes {stable_mosaic.version = 11 : i64} {
  func.func @_resblock_kernel(%arg0: i32, %arg1: memref<1x4x256xf32, #tpu.memory_space<vmem>>, %arg2: memref<8x72xf32, #tpu.memory_space<vmem>>, %arg3: memref<4x72xf32, #tpu.memory_space<vmem>>, %arg4: memref<8x1xf32, #tpu.memory_space<vmem>>, %arg5: memref<4x1xf32, #tpu.memory_space<vmem>>, %arg6: memref<1x4x256xf32, #tpu.memory_space<vmem>>, %arg7: memref<8x512xf32, #tpu.memory_space<vmem>>, %arg8: memref<72x256xf32, #tpu.memory_space<vmem>>, %arg9: memref<8x512xf32, #tpu.memory_space<vmem>>, %arg10: memref<72x256xf32, #tpu.memory_space<vmem>>) attributes {dimension_semantics = [#tpu.dimension_semantics<parallel>], iteration_bounds = array<i64: 2>, scalar_prefetch = 0 : i64, scratch_operands = 4 : i64, tpu.core_type = #tpu.core_type<tc>, window_params = [{transform_indices = @transform_0, window_bounds = array<i64: 1, 4, 256>}, {pipeline_mode = #tpu.pipeline_mode<synchronous>, transform_indices = @transform_1, window_bounds = array<i64: 8, 72>}, {pipeline_mode = #tpu.pipeline_mode<synchronous>, transform_indices = @transform_2, window_bounds = array<i64: 4, 72>}, {pipeline_mode = #tpu.pipeline_mode<synchronous>, transform_indices = @transform_3, window_bounds = array<i64: 8, 1>}, {pipeline_mode = #tpu.pipeline_mode<synchronous>, transform_indices = @transform_4, window_bounds = array<i64: 4, 1>}, {transform_indices = @transform_5, window_bounds = array<i64: 1, 4, 256>}]} {
    %0 = tpu.iota {dimensions = array<i32: 1>} : vector<1x256xi32>
    %c16_i32 = arith.constant 16 : i32
    %c0_i32 = arith.constant 0 : i32
    %1 = arith.cmpi eq, %c16_i32, %c0_i32 : i32
    %c1_i32 = arith.constant 1 : i32
    %2 = arith.select %1, %c1_i32, %c16_i32 : i32
    %3 = vector.broadcast %2 : i32 to vector<1x256xi32>
    %4 = arith.remsi %0, %3 : vector<1x256xi32>
    %c0_i32_0 = arith.constant 0 : i32
    %5 = vector.broadcast %c0_i32_0 : i32 to vector<1x256xi32>
    %6 = arith.cmpi ne, %4, %5 : vector<1x256xi32>
    %c0_i32_1 = arith.constant 0 : i32
    %7 = vector.broadcast %c0_i32_1 : i32 to vector<1x256xi32>
    %8 = arith.cmpi slt, %4, %7 : vector<1x256xi32>
    %c0_i32_2 = arith.constant 0 : i32
    %9 = arith.cmpi slt, %2, %c0_i32_2 : i32
    %10 = vector.broadcast %9 : i1 to vector<1x256xi1>
    %11 = vector.broadcast %10 : vector<1x256xi1> to vector<1x256xi1>
    %12 = arith.xori %8, %11 : vector<1x256xi1>
    %13 = arith.andi %12, %6 : vector<1x256xi1>
    %14 = vector.broadcast %2 : i32 to vector<1x256xi32>
    %15 = arith.addi %4, %14 : vector<1x256xi32>
    %16 = arith.select %13, %15, %4 : vector<1x256xi1>, vector<1x256xi32>
    %c0_i32_3 = arith.constant 0 : i32
    %17 = vector.broadcast %c0_i32_3 : i32 to vector<1x256xi32>
    %18 = arith.cmpi ne, %16, %17 : vector<1x256xi32>
    %c15_i32 = arith.constant 15 : i32
    %19 = vector.broadcast %c15_i32 : i32 to vector<1x256xi32>
    %20 = arith.cmpi ne, %16, %19 : vector<1x256xi32>
    %c0 = arith.constant 0 : index
    %c0_4 = arith.constant 0 : index
    %c0_5 = arith.constant 0 : index
    %21 = vector.load %arg1[%c0, %c0_4, %c0_5] : memref<1x4x256xf32, #tpu.memory_space<vmem>>, vector<1x4x256xf32>
    %22 = vector.shape_cast %21 : vector<1x4x256xf32> to vector<4x256xf32>
    %cst = arith.constant 0.000000e+00 : f32
    %23 = vector.broadcast %cst : f32 to vector<8x512xf32>
    %c0_6 = arith.constant 0 : index
    %c0_7 = arith.constant 0 : index
    %24 = vector.load %arg7[%c0_6, %c0_7] : memref<8x512xf32, #tpu.memory_space<vmem>>, vector<8x512xf32>
    tpu.vector_store %arg7[%c0_6, %c0_7], %23 {strides = array<i32>} : memref<8x512xf32, #tpu.memory_space<vmem>>, vector<8x512xf32>,
    %c0_8 = arith.constant 0 : index
    %c128 = arith.constant 128 : index
    %25 = vector.load %arg7[%c0_8, %c128] : memref<8x512xf32, #tpu.memory_space<vmem>>, vector<4x256xf32>
    tpu.vector_store %arg7[%c0_8, %c128], %22 {strides = array<i32>} : memref<8x512xf32, #tpu.memory_space<vmem>>, vector<4x256xf32>,
    %c0_9 = arith.constant 0 : index
    %c111 = arith.constant 111 : index
    %26 = vector.load %arg7[%c0_9, %c111] : memref<8x512xf32, #tpu.memory_space<vmem>>, vector<8x256xf32>
    %cst_10 = arith.constant 0.000000e+00 : f32
    %27 = vector.shape_cast %18 : vector<1x256xi1> to vector<1x256xi1>
    %28 = vector.broadcast %27 : vector<1x256xi1> to vector<8x256xi1>
    %29 = vector.broadcast %cst_10 : f32 to vector<8x256xf32>
    %30 = arith.select %28, %26, %29 : vector<8x256xi1>, vector<8x256xf32>
    %c0_11 = arith.constant 0 : index
    %c0_12 = arith.constant 0 : index
    %31 = vector.load %arg8[%c0_11, %c0_12] : memref<72x256xf32, #tpu.memory_space<vmem>>, vector<8x256xf32>
    tpu.vector_store %arg8[%c0_11, %c0_12], %30 {strides = array<i32>} : memref<72x256xf32, #tpu.memory_space<vmem>>, vector<8x256xf32>,
    %c0_13 = arith.constant 0 : index
    %c112 = arith.constant 112 : index
    %32 = vector.load %arg7[%c0_13, %c112] : memref<8x512xf32, #tpu.memory_space<vmem>>, vector<8x256xf32>
    %c8 = arith.constant 8 : index
    %c0_14 = arith.constant 0 : index
    %33 = vector.load %arg8[%c8, %c0_14] : memref<72x256xf32, #tpu.memory_space<vmem>>, vector<8x256xf32>
    tpu.vector_store %arg8[%c8, %c0_14], %32 {strides = array<i32>} : memref<72x256xf32, #tpu.memory_space<vmem>>, vector<8x256xf32>,
    %c0_15 = arith.constant 0 : index
    %c113 = arith.constant 113 : index
    %34 = vector.load %arg7[%c0_15, %c113] : memref<8x512xf32, #tpu.memory_space<vmem>>, vector<8x256xf32>
    %cst_16 = arith.constant 0.000000e+00 : f32
    %35 = vector.shape_cast %20 : vector<1x256xi1> to vector<1x256xi1>
    %36 = vector.broadcast %35 : vector<1x256xi1> to vector<8x256xi1>
    %37 = vector.broadcast %cst_16 : f32 to vector<8x256xf32>
    %38 = arith.select %36, %34, %37 : vector<8x256xi1>, vector<8x256xf32>
    %c16 = arith.constant 16 : index
    %c0_17 = arith.constant 0 : index
    %39 = vector.load %arg8[%c16, %c0_17] : memref<72x256xf32, #tpu.memory_space<vmem>>, vector<8x256xf32>
    tpu.vector_store %arg8[%c16, %c0_17], %38 {strides = array<i32>} : memref<72x256xf32, #tpu.memory_space<vmem>>, vector<8x256xf32>,
    %c0_18 = arith.constant 0 : index
    %c127 = arith.constant 127 : index
    %40 = vector.load %arg7[%c0_18, %c127] : memref<8x512xf32, #tpu.memory_space<vmem>>, vector<8x256xf32>
    %cst_19 = arith.constant 0.000000e+00 : f32
    %41 = vector.shape_cast %18 : vector<1x256xi1> to vector<1x256xi1>
    %42 = vector.broadcast %41 : vector<1x256xi1> to vector<8x256xi1>
    %43 = vector.broadcast %cst_19 : f32 to vector<8x256xf32>
    %44 = arith.select %42, %40, %43 : vector<8x256xi1>, vector<8x256xf32>
    %c24 = arith.constant 24 : index
    %c0_20 = arith.constant 0 : index
    %45 = vector.load %arg8[%c24, %c0_20] : memref<72x256xf32, #tpu.memory_space<vmem>>, vector<8x256xf32>
    tpu.vector_store %arg8[%c24, %c0_20], %44 {strides = array<i32>} : memref<72x256xf32, #tpu.memory_space<vmem>>, vector<8x256xf32>,
    %c0_21 = arith.constant 0 : index
    %c128_22 = arith.constant 128 : index
    %46 = vector.load %arg7[%c0_21, %c128_22] : memref<8x512xf32, #tpu.memory_space<vmem>>, vector<8x256xf32>
    %c32 = arith.constant 32 : index
    %c0_23 = arith.constant 0 : index
    %47 = vector.load %arg8[%c32, %c0_23] : memref<72x256xf32, #tpu.memory_space<vmem>>, vector<8x256xf32>
    tpu.vector_store %arg8[%c32, %c0_23], %46 {strides = array<i32>} : memref<72x256xf32, #tpu.memory_space<vmem>>, vector<8x256xf32>,
    %c0_24 = arith.constant 0 : index
    %c129 = arith.constant 129 : index
    %48 = vector.load %arg7[%c0_24, %c129] : memref<8x512xf32, #tpu.memory_space<vmem>>, vector<8x256xf32>
    %cst_25 = arith.constant 0.000000e+00 : f32
    %49 = vector.shape_cast %20 : vector<1x256xi1> to vector<1x256xi1>
    %50 = vector.broadcast %49 : vector<1x256xi1> to vector<8x256xi1>
    %51 = vector.broadcast %cst_25 : f32 to vector<8x256xf32>
    %52 = arith.select %50, %48, %51 : vector<8x256xi1>, vector<8x256xf32>
    %c40 = arith.constant 40 : index
    %c0_26 = arith.constant 0 : index
    %53 = vector.load %arg8[%c40, %c0_26] : memref<72x256xf32, #tpu.memory_space<vmem>>, vector<8x256xf32>
    tpu.vector_store %arg8[%c40, %c0_26], %52 {strides = array<i32>} : memref<72x256xf32, #tpu.memory_space<vmem>>, vector<8x256xf32>,
    %c0_27 = arith.constant 0 : index
    %c143 = arith.constant 143 : index
    %54 = vector.load %arg7[%c0_27, %c143] : memref<8x512xf32, #tpu.memory_space<vmem>>, vector<8x256xf32>
    %cst_28 = arith.constant 0.000000e+00 : f32
    %55 = vector.shape_cast %18 : vector<1x256xi1> to vector<1x256xi1>
    %56 = vector.broadcast %55 : vector<1x256xi1> to vector<8x256xi1>
    %57 = vector.broadcast %cst_28 : f32 to vector<8x256xf32>
    %58 = arith.select %56, %54, %57 : vector<8x256xi1>, vector<8x256xf32>
    %c48 = arith.constant 48 : index
    %c0_29 = arith.constant 0 : index
    %59 = vector.load %arg8[%c48, %c0_29] : memref<72x256xf32, #tpu.memory_space<vmem>>, vector<8x256xf32>
    tpu.vector_store %arg8[%c48, %c0_29], %58 {strides = array<i32>} : memref<72x256xf32, #tpu.memory_space<vmem>>, vector<8x256xf32>,
    %c0_30 = arith.constant 0 : index
    %c144 = arith.constant 144 : index
    %60 = vector.load %arg7[%c0_30, %c144] : memref<8x512xf32, #tpu.memory_space<vmem>>, vector<8x256xf32>
    %c56 = arith.constant 56 : index
    %c0_31 = arith.constant 0 : index
    %61 = vector.load %arg8[%c56, %c0_31] : memref<72x256xf32, #tpu.memory_space<vmem>>, vector<8x256xf32>
    tpu.vector_store %arg8[%c56, %c0_31], %60 {strides = array<i32>} : memref<72x256xf32, #tpu.memory_space<vmem>>, vector<8x256xf32>,
    %c0_32 = arith.constant 0 : index
    %c145 = arith.constant 145 : index
    %62 = vector.load %arg7[%c0_32, %c145] : memref<8x512xf32, #tpu.memory_space<vmem>>, vector<8x256xf32>
    %cst_33 = arith.constant 0.000000e+00 : f32
    %63 = vector.shape_cast %20 : vector<1x256xi1> to vector<1x256xi1>
    %64 = vector.broadcast %63 : vector<1x256xi1> to vector<8x256xi1>
    %65 = vector.broadcast %cst_33 : f32 to vector<8x256xf32>
    %66 = arith.select %64, %62, %65 : vector<8x256xi1>, vector<8x256xf32>
    %c64 = arith.constant 64 : index
    %c0_34 = arith.constant 0 : index
    %67 = vector.load %arg8[%c64, %c0_34] : memref<72x256xf32, #tpu.memory_space<vmem>>, vector<8x256xf32>
    tpu.vector_store %arg8[%c64, %c0_34], %66 {strides = array<i32>} : memref<72x256xf32, #tpu.memory_space<vmem>>, vector<8x256xf32>,
    %c0_35 = arith.constant 0 : index
    %c0_36 = arith.constant 0 : index
    %68 = vector.load %arg2[%c0_35, %c0_36] : memref<8x72xf32, #tpu.memory_space<vmem>>, vector<8x72xf32>
    %c0_37 = arith.constant 0 : index
    %c0_38 = arith.constant 0 : index
    %69 = vector.load %arg8[%c0_37, %c0_38] : memref<72x256xf32, #tpu.memory_space<vmem>>, vector<72x256xf32>
    %cst_39 = arith.constant dense<0.000000e+00> : vector<8x256xf32>
    %70 = tpu.matmul %68, %69, %cst_39 {dimension_numbers = #tpu.dot_dimension_numbers<[1], [0], [0], [1], [0, 0, 1, 1], [], []>} : vector<8x72xf32>, vector<72x256xf32>, vector<8x256xf32> -> vector<8x256xf32>
    %c0_40 = arith.constant 0 : index
    %c0_41 = arith.constant 0 : index
    %71 = vector.load %arg4[%c0_40, %c0_41] : memref<8x1xf32, #tpu.memory_space<vmem>>, vector<8x1xf32>
    %72 = vector.broadcast %71 : vector<8x1xf32> to vector<8x256xf32>
    %73 = arith.addf %70, %72 : vector<8x256xf32>
    %cst_42 = arith.constant 0.000000e+00 : f32
    %74 = vector.broadcast %cst_42 : f32 to vector<8x256xf32>
    %75 = arith.cmpf ogt, %73, %74 : vector<8x256xf32>
    %cst_43 = arith.constant 2.000000e-01 : f32
    %76 = vector.broadcast %cst_43 : f32 to vector<8x256xf32>
    %77 = arith.mulf %76, %73 : vector<8x256xf32>
    %78 = arith.select %75, %73, %77 : vector<8x256xi1>, vector<8x256xf32>
    %cst_44 = arith.constant 0.000000e+00 : f32
    %79 = vector.broadcast %cst_44 : f32 to vector<8x512xf32>
    %c0_45 = arith.constant 0 : index
    %c0_46 = arith.constant 0 : index
    %80 = vector.load %arg9[%c0_45, %c0_46] : memref<8x512xf32, #tpu.memory_space<vmem>>, vector<8x512xf32>
    tpu.vector_store %arg9[%c0_45, %c0_46], %79 {strides = array<i32>} : memref<8x512xf32, #tpu.memory_space<vmem>>, vector<8x512xf32>,
    %c0_47 = arith.constant 0 : index
    %c128_48 = arith.constant 128 : index
    %81 = vector.load %arg9[%c0_47, %c128_48] : memref<8x512xf32, #tpu.memory_space<vmem>>, vector<8x256xf32>
    tpu.vector_store %arg9[%c0_47, %c128_48], %78 {strides = array<i32>} : memref<8x512xf32, #tpu.memory_space<vmem>>, vector<8x256xf32>,
    %c0_49 = arith.constant 0 : index
    %c111_50 = arith.constant 111 : index
    %82 = vector.load %arg9[%c0_49, %c111_50] : memref<8x512xf32, #tpu.memory_space<vmem>>, vector<8x256xf32>
    %cst_51 = arith.constant 0.000000e+00 : f32
    %83 = vector.shape_cast %18 : vector<1x256xi1> to vector<1x256xi1>
    %84 = vector.broadcast %83 : vector<1x256xi1> to vector<8x256xi1>
    %85 = vector.broadcast %cst_51 : f32 to vector<8x256xf32>
    %86 = arith.select %84, %82, %85 : vector<8x256xi1>, vector<8x256xf32>
    %c0_52 = arith.constant 0 : index
    %c0_53 = arith.constant 0 : index
    %87 = vector.load %arg10[%c0_52, %c0_53] : memref<72x256xf32, #tpu.memory_space<vmem>>, vector<8x256xf32>
    tpu.vector_store %arg10[%c0_52, %c0_53], %86 {strides = array<i32>} : memref<72x256xf32, #tpu.memory_space<vmem>>, vector<8x256xf32>,
    %c0_54 = arith.constant 0 : index
    %c112_55 = arith.constant 112 : index
    %88 = vector.load %arg9[%c0_54, %c112_55] : memref<8x512xf32, #tpu.memory_space<vmem>>, vector<8x256xf32>
    %c8_56 = arith.constant 8 : index
    %c0_57 = arith.constant 0 : index
    %89 = vector.load %arg10[%c8_56, %c0_57] : memref<72x256xf32, #tpu.memory_space<vmem>>, vector<8x256xf32>
    tpu.vector_store %arg10[%c8_56, %c0_57], %88 {strides = array<i32>} : memref<72x256xf32, #tpu.memory_space<vmem>>, vector<8x256xf32>,
    %c0_58 = arith.constant 0 : index
    %c113_59 = arith.constant 113 : index
    %90 = vector.load %arg9[%c0_58, %c113_59] : memref<8x512xf32, #tpu.memory_space<vmem>>, vector<8x256xf32>
    %cst_60 = arith.constant 0.000000e+00 : f32
    %91 = vector.shape_cast %20 : vector<1x256xi1> to vector<1x256xi1>
    %92 = vector.broadcast %91 : vector<1x256xi1> to vector<8x256xi1>
    %93 = vector.broadcast %cst_60 : f32 to vector<8x256xf32>
    %94 = arith.select %92, %90, %93 : vector<8x256xi1>, vector<8x256xf32>
    %c16_61 = arith.constant 16 : index
    %c0_62 = arith.constant 0 : index
    %95 = vector.load %arg10[%c16_61, %c0_62] : memref<72x256xf32, #tpu.memory_space<vmem>>, vector<8x256xf32>
    tpu.vector_store %arg10[%c16_61, %c0_62], %94 {strides = array<i32>} : memref<72x256xf32, #tpu.memory_space<vmem>>, vector<8x256xf32>,
    %c0_63 = arith.constant 0 : index
    %c127_64 = arith.constant 127 : index
    %96 = vector.load %arg9[%c0_63, %c127_64] : memref<8x512xf32, #tpu.memory_space<vmem>>, vector<8x256xf32>
    %cst_65 = arith.constant 0.000000e+00 : f32
    %97 = vector.shape_cast %18 : vector<1x256xi1> to vector<1x256xi1>
    %98 = vector.broadcast %97 : vector<1x256xi1> to vector<8x256xi1>
    %99 = vector.broadcast %cst_65 : f32 to vector<8x256xf32>
    %100 = arith.select %98, %96, %99 : vector<8x256xi1>, vector<8x256xf32>
    %c24_66 = arith.constant 24 : index
    %c0_67 = arith.constant 0 : index
    %101 = vector.load %arg10[%c24_66, %c0_67] : memref<72x256xf32, #tpu.memory_space<vmem>>, vector<8x256xf32>
    tpu.vector_store %arg10[%c24_66, %c0_67], %100 {strides = array<i32>} : memref<72x256xf32, #tpu.memory_space<vmem>>, vector<8x256xf32>,
    %c0_68 = arith.constant 0 : index
    %c128_69 = arith.constant 128 : index
    %102 = vector.load %arg9[%c0_68, %c128_69] : memref<8x512xf32, #tpu.memory_space<vmem>>, vector<8x256xf32>
    %c32_70 = arith.constant 32 : index
    %c0_71 = arith.constant 0 : index
    %103 = vector.load %arg10[%c32_70, %c0_71] : memref<72x256xf32, #tpu.memory_space<vmem>>, vector<8x256xf32>
    tpu.vector_store %arg10[%c32_70, %c0_71], %102 {strides = array<i32>} : memref<72x256xf32, #tpu.memory_space<vmem>>, vector<8x256xf32>,
    %c0_72 = arith.constant 0 : index
    %c129_73 = arith.constant 129 : index
    %104 = vector.load %arg9[%c0_72, %c129_73] : memref<8x512xf32, #tpu.memory_space<vmem>>, vector<8x256xf32>
    %cst_74 = arith.constant 0.000000e+00 : f32
    %105 = vector.shape_cast %20 : vector<1x256xi1> to vector<1x256xi1>
    %106 = vector.broadcast %105 : vector<1x256xi1> to vector<8x256xi1>
    %107 = vector.broadcast %cst_74 : f32 to vector<8x256xf32>
    %108 = arith.select %106, %104, %107 : vector<8x256xi1>, vector<8x256xf32>
    %c40_75 = arith.constant 40 : index
    %c0_76 = arith.constant 0 : index
    %109 = vector.load %arg10[%c40_75, %c0_76] : memref<72x256xf32, #tpu.memory_space<vmem>>, vector<8x256xf32>
    tpu.vector_store %arg10[%c40_75, %c0_76], %108 {strides = array<i32>} : memref<72x256xf32, #tpu.memory_space<vmem>>, vector<8x256xf32>,
    %c0_77 = arith.constant 0 : index
    %c143_78 = arith.constant 143 : index
    %110 = vector.load %arg9[%c0_77, %c143_78] : memref<8x512xf32, #tpu.memory_space<vmem>>, vector<8x256xf32>
    %cst_79 = arith.constant 0.000000e+00 : f32
    %111 = vector.shape_cast %18 : vector<1x256xi1> to vector<1x256xi1>
    %112 = vector.broadcast %111 : vector<1x256xi1> to vector<8x256xi1>
    %113 = vector.broadcast %cst_79 : f32 to vector<8x256xf32>
    %114 = arith.select %112, %110, %113 : vector<8x256xi1>, vector<8x256xf32>
    %c48_80 = arith.constant 48 : index
    %c0_81 = arith.constant 0 : index
    %115 = vector.load %arg10[%c48_80, %c0_81] : memref<72x256xf32, #tpu.memory_space<vmem>>, vector<8x256xf32>
    tpu.vector_store %arg10[%c48_80, %c0_81], %114 {strides = array<i32>} : memref<72x256xf32, #tpu.memory_space<vmem>>, vector<8x256xf32>,
    %c0_82 = arith.constant 0 : index
    %c144_83 = arith.constant 144 : index
    %116 = vector.load %arg9[%c0_82, %c144_83] : memref<8x512xf32, #tpu.memory_space<vmem>>, vector<8x256xf32>
    %c56_84 = arith.constant 56 : index
    %c0_85 = arith.constant 0 : index
    %117 = vector.load %arg10[%c56_84, %c0_85] : memref<72x256xf32, #tpu.memory_space<vmem>>, vector<8x256xf32>
    tpu.vector_store %arg10[%c56_84, %c0_85], %116 {strides = array<i32>} : memref<72x256xf32, #tpu.memory_space<vmem>>, vector<8x256xf32>,
    %c0_86 = arith.constant 0 : index
    %c145_87 = arith.constant 145 : index
    %118 = vector.load %arg9[%c0_86, %c145_87] : memref<8x512xf32, #tpu.memory_space<vmem>>, vector<8x256xf32>
    %cst_88 = arith.constant 0.000000e+00 : f32
    %119 = vector.shape_cast %20 : vector<1x256xi1> to vector<1x256xi1>
    %120 = vector.broadcast %119 : vector<1x256xi1> to vector<8x256xi1>
    %121 = vector.broadcast %cst_88 : f32 to vector<8x256xf32>
    %122 = arith.select %120, %118, %121 : vector<8x256xi1>, vector<8x256xf32>
    %c64_89 = arith.constant 64 : index
    %c0_90 = arith.constant 0 : index
    %123 = vector.load %arg10[%c64_89, %c0_90] : memref<72x256xf32, #tpu.memory_space<vmem>>, vector<8x256xf32>
    tpu.vector_store %arg10[%c64_89, %c0_90], %122 {strides = array<i32>} : memref<72x256xf32, #tpu.memory_space<vmem>>, vector<8x256xf32>,
    %c0_91 = arith.constant 0 : index
    %c0_92 = arith.constant 0 : index
    %124 = vector.load %arg3[%c0_91, %c0_92] : memref<4x72xf32, #tpu.memory_space<vmem>>, vector<4x72xf32>
    %c0_93 = arith.constant 0 : index
    %c0_94 = arith.constant 0 : index
    %125 = vector.load %arg10[%c0_93, %c0_94] : memref<72x256xf32, #tpu.memory_space<vmem>>, vector<72x256xf32>
    %cst_95 = arith.constant dense<0.000000e+00> : vector<4x256xf32>
    %126 = tpu.matmul %124, %125, %cst_95 {dimension_numbers = #tpu.dot_dimension_numbers<[1], [0], [0], [1], [0, 0, 1, 1], [], []>} : vector<4x72xf32>, vector<72x256xf32>, vector<4x256xf32> -> vector<4x256xf32>
    %c0_96 = arith.constant 0 : index
    %c0_97 = arith.constant 0 : index
    %127 = vector.load %arg5[%c0_96, %c0_97] : memref<4x1xf32, #tpu.memory_space<vmem>>, vector<4x1xf32>
    %128 = vector.broadcast %127 : vector<4x1xf32> to vector<4x256xf32>
    %129 = arith.addf %126, %128 : vector<4x256xf32>
    %130 = arith.addf %129, %22 : vector<4x256xf32>
    %cst_98 = arith.constant 0.000000e+00 : f32
    %131 = vector.broadcast %cst_98 : f32 to vector<4x256xf32>
    %132 = arith.cmpf ogt, %130, %131 : vector<4x256xf32>
    %cst_99 = arith.constant 2.000000e-01 : f32
    %133 = vector.broadcast %cst_99 : f32 to vector<4x256xf32>
    %134 = arith.mulf %133, %130 : vector<4x256xf32>
    %135 = arith.select %132, %130, %134 : vector<4x256xi1>, vector<4x256xf32>
    %c0_100 = arith.constant 0 : index
    %c0_101 = arith.constant 0 : index
    %c0_102 = arith.constant 0 : index
    %136 = vector.load %arg6[%c0_100, %c0_101, %c0_102] : memref<1x4x256xf32, #tpu.memory_space<vmem>>, vector<1x4x256xf32>
    %137 = vector.shape_cast %136 : vector<1x4x256xf32> to vector<4x256xf32>
    %138 = vector.shape_cast %135 : vector<4x256xf32> to vector<1x4x256xf32>
    tpu.vector_store %arg6[%c0_100, %c0_101, %c0_102], %138 {strides = array<i32>} : memref<1x4x256xf32, #tpu.memory_space<vmem>>, vector<1x4x256xf32>,
    return
  }
  func.func @transform_0(%arg0: i32) -> (i32, i32, i32) {
    %c0_i32 = arith.constant 0 : i32
    %c0_i32_0 = arith.constant 0 : i32
    %c0_i32_1 = arith.constant 0 : i32
    return %arg0, %c0_i32, %c0_i32_0 : i32, i32, i32
  }
  func.func @transform_1(%arg0: i32) -> (i32, i32) {
    %c0_i32 = arith.constant 0 : i32
    %c0_i32_0 = arith.constant 0 : i32
    %c0_i32_1 = arith.constant 0 : i32
    return %c0_i32, %c0_i32_0 : i32, i32
  }
  func.func @transform_2(%arg0: i32) -> (i32, i32) {
    %c0_i32 = arith.constant 0 : i32
    %c0_i32_0 = arith.constant 0 : i32
    %c0_i32_1 = arith.constant 0 : i32
    return %c0_i32, %c0_i32_0 : i32, i32
  }
  func.func @transform_3(%arg0: i32) -> (i32, i32) {
    %c0_i32 = arith.constant 0 : i32
    %c0_i32_0 = arith.constant 0 : i32
    %c0_i32_1 = arith.constant 0 : i32
    return %c0_i32, %c0_i32_0 : i32, i32
  }
  func.func @transform_4(%arg0: i32) -> (i32, i32) {
    %c0_i32 = arith.constant 0 : i32
    %c0_i32_0 = arith.constant 0 : i32
    %c0_i32_1 = arith.constant 0 : i32
    return %c0_i32, %c0_i32_0 : i32, i32
  }
  func.func @transform_5(%arg0: i32) -> (i32, i32, i32) {
    %c0_i32 = arith.constant 0 : i32
    %c0_i32_0 = arith.constant 0 : i32
    %c0_i32_1 = arith.constant 0 : i32
    return %arg0, %c0_i32, %c0_i32_0 : i32, i32, i32
  }
}

</mosaic_0001>

<llo_original>
// kernel: res_block_forward.1
$region0: #{res_block_forward.1}
  #allocation0 [shape = 'u32[]', space=smem, size = 0x4, offset = 0x4, fixed_abs, tag = 'smem constant byte address 0x4 - core index']
  #allocation1 [shape = 'u32[144,128]{1,0:T(1,128)}', space=vmem, size = 0x12000, scoped, tag = 'internal scratch']
  #allocation2 [shape = 'f32[8,512]{1,0:T(8,128)}', space=vmem, size = 0x4000, scoped, tag = 'scratch operand']
  #allocation3 [shape = 'f32[72,256]{1,0:T(8,128)}', space=vmem, size = 0x12000, scoped, tag = 'scratch operand']
  #allocation4 [shape = 'f32[8,512]{1,0:T(8,128)}', space=vmem, size = 0x4000, scoped, tag = 'scratch operand']
  #allocation5 [shape = 'f32[72,256]{1,0:T(8,128)}', space=vmem, size = 0x12000, scoped, tag = 'scratch operand']
  %s0 = inlined_call_operand.vmem [shape: f32[2,4,256], index: 0, kind: input, shape index: {}]
  %s1 = inlined_call_operand.vmem [shape: f32[8,72], index: 1, kind: input, shape index: {}]
  %s2 = inlined_call_operand.vmem [shape: f32[4,72], index: 2, kind: input, shape index: {}]
  %s3 = inlined_call_operand.vmem [shape: f32[8,1], index: 3, kind: input, shape index: {}]
  %s4 = inlined_call_operand.vmem [shape: f32[4,1], index: 4, kind: input, shape index: {}]
  %s5 = inlined_call_operand.vmem [shape: f32[2,4,256], index: 5, kind: output, shape index: {}]
  %s6 = sld [smem:[#allocation0]]
  $region53: #{res_block_forward.1} parent=0
    _
  %s8 = ssub.s32 1, %s6
  %s9 = scalar_select 0, %s8, %s6
  loop: start=0, step=1, limit=4
  $region2: #{res_block_forward.1} parent=0 // loop_pre_header
    _
  $region3: #{res_block_forward.1} parent=0 // loop_header
    %s11 = sphi 0, %s15
    %p12 = scmp.ge.s32.totalorder %s11, 4
    %s21 = sphi 0, %s23
    %s24 = sphi 0, %s21
    %s25 = sphi 0, %s24
    %s41 = sphi 0, %s25
    %s45 = sphi 0, %s45
    %s47 = sphi 0, %s45
    %s48 = sphi 0, %s47
    %s62 = sphi 0, %s48
    %s66 = sphi 0, %s66
    %s68 = sphi 0, %s66
    %s69 = sphi 0, %s68
    %s83 = sphi 0, %s69
    %s87 = sphi 0, %s87
    %s89 = sphi 0, %s87
    %s90 = sphi 0, %s89
    %s104 = sphi 0, %s90
    %s108 = sphi 0, %s108
    %s110 = sphi 0, %s108
    %s111 = sphi 0, %s110
    %s125 = sphi 0, %s111
    %s131 = sphi 0, %s133
    %s134 = sphi 0, %s131
    %s135 = sphi 0, %s134
    %s151 = sphi 0, %s135
  $region4: #{res_block_forward.1} parent=0 // loop_header_branch
    %14 = sbr.rel (%p12) target = $region8
  $region5: #{res_block_forward.1} parent=0 // loop_body
    %s16 = ssub.s32 %s11, 1
    %s17 = ssub.s32 %s11, 2
    %s18 = sadd.s32 %s11, 1
    %s19 = ssub.s32 %s11, %s18
    %p20 = scmp.eq.s32.totalorder %s19, 0
    %s22 = sadd.s32 %s21, 1
    %s23 = scalar_select %p20, %s21, %s22
    %p26 = pneg %p20
    %p27 = scmp.eq.s32.totalorder %s11, 1
    %p28 = por %p26, %p27
    %p29 = scmp.ne.s32.totalorder %s21, %s24
    %p30 = scmp.eq.s32.totalorder %s11, 0
    %p31 = por %p29, %p30
    %p32 = scmp.ne.s32.totalorder %s21, %s24
    %p33 = scmp.eq.s32.totalorder %s16, 1
    %p34 = por %p32, %p33
    %p35 = scmp.ne.s32.totalorder %s24, %s25
    %p36 = scmp.eq.s32.totalorder %s16, 0
    %p37 = por %p35, %p36
    %p38 = scmp.ne.s32.totalorder %s24, %s25
    %p39 = scmp.eq.s32.totalorder %s17, 1
    %p40 = por %p38, %p39
    %p42 = scmp.ne.s32.totalorder %s25, %s41
    %p43 = scmp.eq.s32.totalorder %s17, 0
    %p44 = por %p42, %p43
    %s46 = sadd.s32 %s45, 1
    %p49 = scmp.eq.s32.totalorder %s11, 1
    %p50 = scmp.ne.s32.totalorder %s45, %s47
    %p51 = scmp.eq.s32.totalorder %s11, 0
    %p52 = por %p50, %p51
    %p53 = scmp.ne.s32.totalorder %s45, %s47
    %p54 = scmp.eq.s32.totalorder %s16, 1
    %p55 = por %p53, %p54
    %p56 = scmp.ne.s32.totalorder %s47, %s48
    %p57 = scmp.eq.s32.totalorder %s16, 0
    %p58 = por %p56, %p57
    %p59 = scmp.ne.s32.totalorder %s47, %s48
    %p60 = scmp.eq.s32.totalorder %s17, 1
    %p61 = por %p59, %p60
    %p63 = scmp.ne.s32.totalorder %s48, %s62
    %p64 = scmp.eq.s32.totalorder %s17, 0
    %p65 = por %p63, %p64
    %s67 = sadd.s32 %s66, 1
    %p70 = scmp.eq.s32.totalorder %s11, 1
    %p71 = scmp.ne.s32.totalorder %s66, %s68
    %p72 = scmp.eq.s32.totalorder %s11, 0
    %p73 = por %p71, %p72
    %p74 = scmp.ne.s32.totalorder %s66, %s68
    %p75 = scmp.eq.s32.totalorder %s16, 1
    %p76 = por %p74, %p75
    %p77 = scmp.ne.s32.totalorder %s68, %s69
    %p78 = scmp.eq.s32.totalorder %s16, 0
    %p79 = por %p77, %p78
    %p80 = scmp.ne.s32.totalorder %s68, %s69
    %p81 = scmp.eq.s32.totalorder %s17, 1
    %p82 = por %p80, %p81
    %p84 = scmp.ne.s32.totalorder %s69, %s83
    %p85 = scmp.eq.s32.totalorder %s17, 0
    %p86 = por %p84, %p85
    %s88 = sadd.s32 %s87, 1
    %p91 = scmp.eq.s32.totalorder %s11, 1
    %p92 = scmp.ne.s32.totalorder %s87, %s89
    %p93 = scmp.eq.s32.totalorder %s11, 0
    %p94 = por %p92, %p93
    %p95 = scmp.ne.s32.totalorder %s87, %s89
    %p96 = scmp.eq.s32.totalorder %s16, 1
    %p97 = por %p95, %p96
    %p98 = scmp.ne.s32.totalorder %s89, %s90
    %p99 = scmp.eq.s32.totalorder %s16, 0
    %p100 = por %p98, %p99
    %p101 = scmp.ne.s32.totalorder %s89, %s90
    %p102 = scmp.eq.s32.totalorder %s17, 1
    %p103 = por %p101, %p102
    %p105 = scmp.ne.s32.totalorder %s90, %s104
    %p106 = scmp.eq.s32.totalorder %s17, 0
    %p107 = por %p105, %p106
    %s109 = sadd.s32 %s108, 1
    %p112 = scmp.eq.s32.totalorder %s11, 1
    %p113 = scmp.ne.s32.totalorder %s108, %s110
    %p114 = scmp.eq.s32.totalorder %s11, 0
    %p115 = por %p113, %p114
    %p116 = scmp.ne.s32.totalorder %s108, %s110
    %p117 = scmp.eq.s32.totalorder %s16, 1
    %p118 = por %p116, %p117
    %p119 = scmp.ne.s32.totalorder %s110, %s111
    %p120 = scmp.eq.s32.totalorder %s16, 0
    %p121 = por %p119, %p120
    %p122 = scmp.ne.s32.totalorder %s110, %s111
    %p123 = scmp.eq.s32.totalorder %s17, 1
    %p124 = por %p122, %p123
    %p126 = scmp.ne.s32.totalorder %s111, %s125
    %p127 = scmp.eq.s32.totalorder %s17, 0
    %p128 = por %p126, %p127
    %s129 = ssub.s32 %s11, %s18
    %p130 = scmp.eq.s32.totalorder %s129, 0
    %s132 = sadd.s32 %s131, 1
    %s133 = scalar_select %p130, %s131, %s132
    %p136 = pneg %p130
    %p137 = scmp.eq.s32.totalorder %s11, 1
    %p138 = por %p136, %p137
    %p139 = scmp.ne.s32.totalorder %s131, %s134
    %p140 = scmp.eq.s32.totalorder %s11, 0
    %p141 = por %p139, %p140
    %p142 = scmp.ne.s32.totalorder %s131, %s134
    %p143 = scmp.eq.s32.totalorder %s16, 1
    %p144 = por %p142, %p143
    %p145 = scmp.ne.s32.totalorder %s134, %s135
    %p146 = scmp.eq.s32.totalorder %s16, 0
    %p147 = por %p145, %p146
    %p148 = scmp.ne.s32.totalorder %s134, %s135
    %p149 = scmp.eq.s32.totalorder %s17, 1
    %p150 = por %p148, %p149
    %p152 = scmp.ne.s32.totalorder %s135, %s151
    %p153 = scmp.eq.s32.totalorder %s17, 0
    %p154 = por %p152, %p153
    %p155 = scmp.le.s32.totalorder 1, %s11
    %p156 = scmp.lt.s32.totalorder %s11, 3
    %p157 = pnand %p155, %p156
    %p158 = pneg %p157
    // Predicated region
    $region9: #{res_block_forward.1} parent=5 // pred_check
      _
    $region10: #{res_block_forward.1} parent=5 // pred_check_branch
      %160 = sbr.rel (%p157) target = $region12
    $region11: #{res_block_forward.1} parent=5 // pred_region
      %s161 = ssub.s32 %s11, 1
      // Predicated region
      $region13: #{res_block_forward.1} parent=11 // pred_check
        %p162 = pneg %p58
      $region14: #{res_block_forward.1} parent=11 // pred_check_branch
        %164 = sbr.rel (%p162) target = $region16
      $region15: #{res_block_forward.1} parent=11 // pred_region
        _
      $region16: #{res_block_forward.1} parent=11 // pred_fallthru
        _
      // Predicated region
      $region17: #{res_block_forward.1} parent=11 // pred_check
        %p165 = pneg %p79
      $region18: #{res_block_forward.1} parent=11 // pred_check_branch
        %167 = sbr.rel (%p165) target = $region20
      $region19: #{res_block_forward.1} parent=11 // pred_region
        _
      $region20: #{res_block_forward.1} parent=11 // pred_fallthru
        _
      // Predicated region
      $region21: #{res_block_forward.1} parent=11 // pred_check
        %p168 = pneg %p100
      $region22: #{res_block_forward.1} parent=11 // pred_check_branch
        %170 = sbr.rel (%p168) target = $region24
      $region23: #{res_block_forward.1} parent=11 // pred_region
        _
      $region24: #{res_block_forward.1} parent=11 // pred_fallthru
        _
      // Predicated region
      $region25: #{res_block_forward.1} parent=11 // pred_check
        %p171 = pneg %p121
      $region26: #{res_block_forward.1} parent=11 // pred_check_branch
        %173 = sbr.rel (%p171) target = $region28
      $region27: #{res_block_forward.1} parent=11 // pred_region
        _
      $region28: #{res_block_forward.1} parent=11 // pred_fallthru
        _
    $region12: #{res_block_forward.1} parent=5 // pred_fallthru
      _
    %p174 = scmp.lt.s32.totalorder %s11, 2
    // Predicated region
    $region29: #{res_block_forward.1} parent=5 // pred_check
      %p175 = pneg %p174
    $region30: #{res_block_forward.1} parent=5 // pred_check_branch
      %177 = sbr.rel (%p175) target = $region32
    $region31: #{res_block_forward.1} parent=5 // pred_region
      // Predicated region
      $region33: #{res_block_forward.1} parent=31 // pred_check
        %p178 = pneg %p31
      $region34: #{res_block_forward.1} parent=31 // pred_check_branch
        %180 = sbr.rel (%p178) target = $region36
      $region35: #{res_block_forward.1} parent=31 // pred_region
        %p181 = scmp.lt.s32.totalorder %s11, 1
        %s182 = scalar_select %p181, %s11, 1
        %s183 = smul.addr %s182, 2
        %s184 = smul.addr %s183, 4
        %s185 = scalar_lea.vmem %s0, %s184
      $region36: #{res_block_forward.1} parent=31 // pred_fallthru
        _
    $region32: #{res_block_forward.1} parent=5 // pred_fallthru
      _
    %p186 = scmp.le.s32.totalorder 1, %s11
    %p187 = scmp.lt.s32.totalorder %s11, 3
    %p188 = pnand %p186, %p187
    %p189 = pneg %p188
    // Predicated region
    $region37: #{res_block_forward.1} parent=5 // pred_check
      _
    $region38: #{res_block_forward.1} parent=5 // pred_check_branch
      %191 = sbr.rel (%p188) target = $region40
    $region39: #{res_block_forward.1} parent=5 // pred_region
      %s192 = ssub.s32 %s11, 1
      %p193 = scmp.lt.s32.totalorder %s16, 1
      %s194 = scalar_select %p193, %s16, 1
      %s195 = smul.addr %s194, 2
      %s196 = smul.addr %s195, 4
      %s197 = scalar_lea.vmem %s0, %s196
      %p198 = pneg %p37
      %p199 = pneg %p34
      %p200 = pneg %p58
      %p201 = pneg %p55
      %p202 = pneg %p79
      %p203 = pneg %p76
      %p204 = pneg %p100
      %p205 = pneg %p97
      %p206 = pneg %p121
      %p207 = pneg %p118
      %p208 = pneg %p147
      %p209 = pneg %p144
      %p210 = scmp.lt.s32.totalorder %s16, 1
      %s211 = scalar_select %p210, %s16, 1
      %s212 = smul.addr %s211, 2
      %s213 = smul.addr %s212, 4
      %s214 = scalar_lea.vmem %s5, %s213
      %p215 = scmp.lt.s32.totalorder %s16, 1
      %s216 = scalar_select %p215, %s16, 1
      %s217 = smul.addr %s216, 2
      %s218 = smul.addr %s217, 4
      %s219 = scalar_lea.vmem %s0, %s218
      %p220 = scmp.lt.s32.totalorder %s16, 1
      %s221 = scalar_select %p220, %s16, 1
      %s222 = smul.addr %s221, 2
      %s223 = smul.addr %s222, 4
      %s224 = scalar_lea.vmem %s5, %s223
      %v225 = vlaneseq
      %v226 = vand.u32 %v225, 127
      %v227 = vadd.s32 %v226, 128
      %vm228 = vcmp.lt.s32.totalorder %v226, 0
      %v229 = vsub.s32 0, %v226
      %v230 = vsel %vm228, %v229, %v226
      %v231 = vshrl.u32 %v230, 4
      %v232 = vand.u32 %v230, 15
      %v233 = vsub.s32 0, %v232
      %v234 = vsel %vm228, %v233, %v232
      %vm235 = vcmp.lt.s32.totalorder %v227, 0
      %v236 = vsub.s32 0, %v227
      %v237 = vsel %vm235, %v236, %v227
      %v238 = vshrl.u32 %v237, 4
      %v239 = vand.u32 %v237, 15
      %v240 = vsub.s32 0, %v239
      %v241 = vsel %vm235, %v240, %v239
      %vm242 = vcmp.ne.s32.totalorder %v234, 0
      %vm243 = vcmp.ne.s32.totalorder %v241, 0
      %vm244 = vcmp.lt.s32.totalorder %v234, 0
      %vm245 = vcmp.lt.s32.totalorder %v241, 0
      %vm246 = vmand %vm244, %vm242
      %vm247 = vmand %vm245, %vm243
      %v248 = vadd.s32 %v234, 16
      %v249 = vadd.s32 %v241, 16
      %v250 = vsel %vm246, %v248, %v234
      %v251 = vsel %vm247, %v249, %v241
      %vm252 = vcmp.ne.s32.totalorder %v250, 0
      %vm253 = vcmp.ne.s32.totalorder %v251, 0
      %vm254 = vcmp.ne.s32.totalorder %v250, 15
      %vm255 = vcmp.ne.s32.totalorder %v251, 15
      %v256 = vld [vmem:[%s219] sm:$0xff]
      %257 = vst [vmem:[#allocation2] sm:$0xff] 0.0
      %258 = vst [vmem:[#allocation2 + $0x8] sm:$0xff] 0.0
      %259 = vst [vmem:[#allocation2 + $0x10] sm:$0xff] 0.0
      %260 = vst [vmem:[#allocation2 + $0x18] sm:$0xff] 0.0
      %v262 = vcombine.high %v256, %v256
      %264 = vst [vmem:[#allocation2 + $0x8] sm:$0xf] %v256
      %265 = vst [vmem:[#allocation2 + $0x10] sm:$0xf] %v262
      %v266 = vld [vmem:[#allocation2] sm:$0xff]
      %v267 = vld [vmem:[#allocation2 + $0x8] sm:$0xff]
      %v268 = vld [vmem:[#allocation2 + $0x10] sm:$0xff]
      %v269 = vsel %vm252, 1, 0
      %v270 = vsel %vm253, 1, 0
      %vm271 = vcmp.eq.s32.totalorder %v269, 1
      %vm272 = vcmp.eq.s32.totalorder %v270, 1
      %276 = vrot.lane.b32.xlu0 %v266, 17
      %v277 = vpop.permute.xlu0 %276
      %278 = vrot.lane.b32.xlu0 %v267, 17
      %v279 = vpop.permute.xlu0 %278
      %280 = vrot.lane.b32.xlu0 %v268, 17
      %v281 = vpop.permute.xlu0 %280
      %vm282 = vcmask 138240
      %v283 = vsel %vm282, %v277, %v279
      %v284 = vsel %vm282, %v279, %v281
      %v287 = vsel %vm271, %v283, 0.0
      %v288 = vsel %vm272, %v284, 0.0
      %289 = vst [vmem:[#allocation3] sm:$0xff] %v287
      %290 = vst [vmem:[#allocation3 + $0x8] sm:$0xff] %v288
      %v291 = vld [vmem:[#allocation2] sm:$0xff]
      %v292 = vld [vmem:[#allocation2 + $0x8] sm:$0xff]
      %v293 = vld [vmem:[#allocation2 + $0x10] sm:$0xff]
      %297 = vrot.lane.b32.xlu0 %v291, 16
      %v298 = vpop.permute.xlu0 %297
      %299 = vrot.lane.b32.xlu0 %v292, 16
      %v300 = vpop.permute.xlu0 %299
      %301 = vrot.lane.b32.xlu0 %v293, 16
      %v302 = vpop.permute.xlu0 %301
      %vm303 = vcmask 130048
      %v304 = vsel %vm303, %v298, %v300
      %v305 = vsel %vm303, %v300, %v302
      %308 = vst [vmem:[#allocation3 + $0x10] sm:$0xff] %v304
      %309 = vst [vmem:[#allocation3 + $0x18] sm:$0xff] %v305
      %v310 = vld [vmem:[#allocation2] sm:$0xff]
      %v311 = vld [vmem:[#allocation2 + $0x8] sm:$0xff]
      %v312 = vld [vmem:[#allocation2 + $0x10] sm:$0xff]
      %v313 = vsel %vm254, 1, 0
      %v314 = vsel %vm255, 1, 0
      %vm315 = vcmp.eq.s32.totalorder %v313, 1
      %vm316 = vcmp.eq.s32.totalorder %v314, 1
      %320 = vrot.lane.b32.xlu0 %v310, 15
      %v321 = vpop.permute.xlu0 %320
      %322 = vrot.lane.b32.xlu0 %v311, 15
      %v323 = vpop.permute.xlu0 %322
      %324 = vrot.lane.b32.xlu0 %v312, 15
      %v325 = vpop.permute.xlu0 %324
      %vm326 = vcmask 121856
      %v327 = vsel %vm326, %v321, %v323
      %v328 = vsel %vm326, %v323, %v325
      %v331 = vsel %vm315, %v327, 0.0
      %v332 = vsel %vm316, %v328, 0.0
      %333 = vst [vmem:[#allocation3 + $0x20] sm:$0xff] %v331
      %334 = vst [vmem:[#allocation3 + $0x28] sm:$0xff] %v332
      %v335 = vld [vmem:[#allocation2] sm:$0xff]
      %v336 = vld [vmem:[#allocation2 + $0x8] sm:$0xff]
      %v337 = vld [vmem:[#allocation2 + $0x10] sm:$0xff]
      %341 = vrot.lane.b32.xlu0 %v335, 1
      %v342 = vpop.permute.xlu0 %341
      %343 = vrot.lane.b32.xlu0 %v336, 1
      %v344 = vpop.permute.xlu0 %343
      %345 = vrot.lane.b32.xlu0 %v337, 1
      %v346 = vpop.permute.xlu0 %345
      %vm347 = vcmask 7168
      %v348 = vsel %vm347, %v342, %v344
      %v349 = vsel %vm347, %v344, %v346
      %v352 = vsel %vm271, %v348, 0.0
      %v353 = vsel %vm272, %v349, 0.0
      %354 = vst [vmem:[#allocation3 + $0x30] sm:$0xff] %v352
      %355 = vst [vmem:[#allocation3 + $0x38] sm:$0xff] %v353
      %v356 = vld [vmem:[#allocation2 + $0x8] sm:$0xff]
      %v357 = vld [vmem:[#allocation2 + $0x10] sm:$0xff]
      %358 = vst [vmem:[#allocation3 + $0x40] sm:$0xff] %v356
      %359 = vst [vmem:[#allocation3 + $0x48] sm:$0xff] %v357
      %v360 = vld [vmem:[#allocation2 + $0x8] sm:$0xff]
      %v361 = vld [vmem:[#allocation2 + $0x10] sm:$0xff]
      %v362 = vld [vmem:[#allocation2 + $0x18] sm:$0xff]
      %366 = vrot.lane.b32.xlu0 %v360, 127
      %v367 = vpop.permute.xlu0 %366
      %368 = vrot.lane.b32.xlu0 %v361, 127
      %v369 = vpop.permute.xlu0 %368
      %370 = vrot.lane.b32.xlu0 %v362, 127
      %v371 = vpop.permute.xlu0 %370
      %vm372 = vcmask 1039360
      %v373 = vsel %vm372, %v367, %v369
      %v374 = vsel %vm372, %v369, %v371
      %v377 = vsel %vm315, %v373, 0.0
      %v378 = vsel %vm316, %v374, 0.0
      %379 = vst [vmem:[#allocation3 + $0x50] sm:$0xff] %v377
      %380 = vst [vmem:[#allocation3 + $0x58] sm:$0xff] %v378
      %v381 = vld [vmem:[#allocation2 + $0x8] sm:$0xff]
      %v382 = vld [vmem:[#allocation2 + $0x10] sm:$0xff]
      %v383 = vld [vmem:[#allocation2 + $0x18] sm:$0xff]
      %387 = vrot.lane.b32.xlu0 %v381, 113
      %v388 = vpop.permute.xlu0 %387
      %389 = vrot.lane.b32.xlu0 %v382, 113
      %v390 = vpop.permute.xlu0 %389
      %391 = vrot.lane.b32.xlu0 %v383, 113
      %v392 = vpop.permute.xlu0 %391
      %vm393 = vcmask 924672
      %v394 = vsel %vm393, %v388, %v390
      %v395 = vsel %vm393, %v390, %v392
      %v398 = vsel %vm271, %v394, 0.0
      %v399 = vsel %vm272, %v395, 0.0
      %400 = vst [vmem:[#allocation3 + $0x60] sm:$0xff] %v398
      %401 = vst [vmem:[#allocation3 + $0x68] sm:$0xff] %v399
      %v402 = vld [vmem:[#allocation2 + $0x8] sm:$0xff]
      %v403 = vld [vmem:[#allocation2 + $0x10] sm:$0xff]
      %v404 = vld [vmem:[#allocation2 + $0x18] sm:$0xff]
      %408 = vrot.lane.b32.xlu0 %v402, 112
      %v409 = vpop.permute.xlu0 %408
      %410 = vrot.lane.b32.xlu0 %v403, 112
      %v411 = vpop.permute.xlu0 %410
      %412 = vrot.lane.b32.xlu0 %v404, 112
      %v413 = vpop.permute.xlu0 %412
      %vm414 = vcmask 916480
      %v415 = vsel %vm414, %v409, %v411
      %v416 = vsel %vm414, %v411, %v413
      %419 = vst [vmem:[#allocation3 + $0x70] sm:$0xff] %v415
      %420 = vst [vmem:[#allocation3 + $0x78] sm:$0xff] %v416
      %v421 = vld [vmem:[#allocation2 + $0x8] sm:$0xff]
      %v422 = vld [vmem:[#allocation2 + $0x10] sm:$0xff]
      %v423 = vld [vmem:[#allocation2 + $0x18] sm:$0xff]
      %427 = vrot.lane.b32.xlu0 %v421, 111
      %v428 = vpop.permute.xlu0 %427
      %429 = vrot.lane.b32.xlu0 %v422, 111
      %v430 = vpop.permute.xlu0 %429
      %431 = vrot.lane.b32.xlu0 %v423, 111
      %v432 = vpop.permute.xlu0 %431
      %vm433 = vcmask 908288
      %v434 = vsel %vm433, %v428, %v430
      %v435 = vsel %vm433, %v430, %v432
      %v438 = vsel %vm315, %v434, 0.0
      %v439 = vsel %vm316, %v435, 0.0
      %440 = vst [vmem:[#allocation3 + $0x80] sm:$0xff] %v438
      %441 = vst [vmem:[#allocation3 + $0x88] sm:$0xff] %v439
      %v442 = vld [vmem:[%s1] sm:$0xff]
      %v443 = vld [vmem:[#allocation3] sm:$0xff]
      %v444 = vld [vmem:[#allocation3 + $0x8] sm:$0xff]
      %v445 = vld [vmem:[#allocation3 + $0x10] sm:$0xff]
      %v446 = vld [vmem:[#allocation3 + $0x18] sm:$0xff]
      %v447 = vld [vmem:[#allocation3 + $0x20] sm:$0xff]
      %v448 = vld [vmem:[#allocation3 + $0x28] sm:$0xff]
      %v449 = vld [vmem:[#allocation3 + $0x30] sm:$0xff]
      %v450 = vld [vmem:[#allocation3 + $0x38] sm:$0xff]
      %v451 = vld [vmem:[#allocation3 + $0x40] sm:$0xff]
      %v452 = vld [vmem:[#allocation3 + $0x48] sm:$0xff]
      %v453 = vld [vmem:[#allocation3 + $0x50] sm:$0xff]
      %v454 = vld [vmem:[#allocation3 + $0x58] sm:$0xff]
      %v455 = vld [vmem:[#allocation3 + $0x60] sm:$0xff]
      %v456 = vld [vmem:[#allocation3 + $0x68] sm:$0xff]
      %v457 = vld [vmem:[#allocation3 + $0x70] sm:$0xff]
      %v458 = vld [vmem:[#allocation3 + $0x78] sm:$0xff]
      %v459 = vld [vmem:[#allocation3 + $0x80] sm:$0xff]
      %v460 = vld [vmem:[#allocation3 + $0x88] sm:$0xff]
      %v461 = vld [vmem:[%s3] sm:$0xff]
      %463 = vset.pattern.permute.xlu0 0
      %464 = vperm.xlu0 %463, %v461
      %v465 = vpop.permute.xlu0 %464
      %vm467 = vcmask 588800
      %v469 = vsel %vm467, %v442, 0
      %471 = vmatprep.subr.mxu0 %v444
      %472 = vmatpush1.msra.mxu0 %v443
      %473 = vmatprep.subr.mxu0 %v446
      %474 = vmatpush1.msra.mxu0 %v445
      %475 = vmatprep.subr.mxu0 %v448
      %476 = vmatpush1.msra.mxu0 %v447
      %477 = vmatprep.subr.mxu0 %v450
      %478 = vmatpush1.msra.mxu0 %v449
      %479 = vmatprep.subr.mxu0 %v452
      %480 = vmatpush1.msra.mxu0 %v451
      %481 = vmatprep.subr.mxu0 %v454
      %482 = vmatpush1.msra.mxu0 %v453
      %483 = vmatprep.subr.mxu0 %v456
      %484 = vmatpush1.msra.mxu0 %v455
      %485 = vmatprep.subr.mxu0 %v458
      %486 = vmatpush1.msra.mxu0 %v457
      %487 = vmatprep.subr.mxu0 %v460
      %488 = vmatpush1.msra.mxu0 %v459
      %489 = vmatprep.subr.mxu0 0.0
      %490 = vmatpush1.msra.mxu0 0.0
      %491 = vmatprep.subr.mxu0 0.0
      %492 = vmatpush1.msra.mxu0 0.0
      %493 = vmatprep.subr.mxu0 0.0
      %494 = vmatpush1.msra.mxu0 0.0
      %495 = vmatprep.subr.mxu0 0.0
      %496 = vmatpush1.msra.mxu0 0.0
      %497 = vmatprep.subr.mxu0 0.0
      %498 = vmatpush1.msra.mxu0 0.0
      %499 = vmatprep.subr.mxu0 0.0
      %500 = vmatpush1.msra.mxu0 0.0
      %501 = vmatprep.subr.mxu0 0.0
      %502 = vmatpush1.msra.mxu0 0.0
      %503 = vmatprep.subr.mxu0 0.0
      %504 = vmatpush1.msra.mxu0 0.0
      %505 = vmatprep.subr.mxu0 0.0
      %506 = vmatpush1.msra.mxu0 0.0
      %507 = vmatprep.subr.mxu0 0.0
      %508 = vmatpush1.msra.mxu0 0.0
      %509 = vmatprep.subr.mxu0 0.0
      %510 = vmatpush1.msra.mxu0 0.0
      %511 = vmatprep.subr.mxu0 0.0
      %512 = vmatpush1.msra.mxu0 0.0
      %513 = vmatprep.subr.mxu0 0.0
      %514 = vmatpush1.msra.mxu0 0.0
      %515 = vmatprep.subr.mxu0 0.0
      %516 = vmatpush1.msra.mxu0 0.0
      %517 = vmatprep.subr.mxu0 0.0
      %518 = vmatpush1.msra.mxu0 0.0
      %519 = vmatprep.subr.mxu0 0.0
      %520 = vmatpush1.msra.mxu0 0.0
      %521 = vmatprep.subr.mxu0 0.0
      %522 = vmatpush1.msra.mxu0 0.0
      %523 = vmatprep.subr.mxu0 0.0
      %524 = vmatpush1.msra.mxu0 0.0
      %525 = vmatprep.subr.mxu0 0.0
      %526 = vmatpush1.msra.mxu0 0.0
      %527 = vmatprep.subr.mxu0 0.0
      %528 = vmatpush1.msra.mxu0 0.0
      %529 = vmatprep.subr.mxu0 0.0
      %530 = vmatpush1.msra.mxu0 0.0
      %531 = vmatprep.subr.mxu0 0.0
      %532 = vmatpush1.msra.mxu0 0.0
      %533 = vmatprep.subr.mxu0 0.0
      %534 = vmatpush1.msra.mxu0 0.0
      %535 = vmatprep.mubr.f32.mxu0 0.0
      %536 = vmatmul.mubr.f32.gmra.mrb[0].mxu0 %v469
      %v537 = vpop.f32.mrb[0].mxu0
      %v538 = vadd.f32 %v465, %v537
      %v539 = vpop.f32.mrb[0].mxu0
      %v540 = vadd.f32 %v465, %v539
      %541 = vdwg.mxu0
      %vm542 = vcmp.gt.f32.partialorder %v538, 0.0
      %vm543 = vcmp.gt.f32.partialorder %v540, 0.0
      %v544 = vmul.f32 %v538, 0.2
      %v545 = vmul.f32 %v540, 0.2
      %v546 = vsel %vm542, %v538, %v544
      %v547 = vsel %vm543, %v540, %v545
      %548 = vst [vmem:[#allocation4] sm:$0xff] 0.0
      %549 = vst [vmem:[#allocation4 + $0x8] sm:$0xff] 0.0
      %550 = vst [vmem:[#allocation4 + $0x10] sm:$0xff] 0.0
      %551 = vst [vmem:[#allocation4 + $0x18] sm:$0xff] 0.0
      %552 = vst [vmem:[#allocation4 + $0x8] sm:$0xff] %v546
      %553 = vst [vmem:[#allocation4 + $0x10] sm:$0xff] %v547
      %v554 = vld [vmem:[#allocation4] sm:$0xff]
      %v555 = vld [vmem:[#allocation4 + $0x8] sm:$0xff]
      %v556 = vld [vmem:[#allocation4 + $0x10] sm:$0xff]
      %560 = vrot.lane.b32.xlu0 %v554, 17
      %v561 = vpop.permute.xlu0 %560
      %562 = vrot.lane.b32.xlu0 %v555, 17
      %v563 = vpop.permute.xlu0 %562
      %564 = vrot.lane.b32.xlu0 %v556, 17
      %v565 = vpop.permute.xlu0 %564
      %v566 = vsel %vm282, %v561, %v563
      %v567 = vsel %vm282, %v563, %v565
      %v570 = vsel %vm271, %v566, 0.0
      %v571 = vsel %vm272, %v567, 0.0
      %572 = vst [vmem:[#allocation5] sm:$0xff] %v570
      %573 = vst [vmem:[#allocation5 + $0x8] sm:$0xff] %v571
      %v574 = vld [vmem:[#allocation4] sm:$0xff]
      %v575 = vld [vmem:[#allocation4 + $0x8] sm:$0xff]
      %v576 = vld [vmem:[#allocation4 + $0x10] sm:$0xff]
      %580 = vrot.lane.b32.xlu0 %v574, 16
      %v581 = vpop.permute.xlu0 %580
      %582 = vrot.lane.b32.xlu0 %v575, 16
      %v583 = vpop.permute.xlu0 %582
      %584 = vrot.lane.b32.xlu0 %v576, 16
      %v585 = vpop.permute.xlu0 %584
      %v586 = vsel %vm303, %v581, %v583
      %v587 = vsel %vm303, %v583, %v585
      %590 = vst [vmem:[#allocation5 + $0x10] sm:$0xff] %v586
      %591 = vst [vmem:[#allocation5 + $0x18] sm:$0xff] %v587
      %v592 = vld [vmem:[#allocation4] sm:$0xff]
      %v593 = vld [vmem:[#allocation4 + $0x8] sm:$0xff]
      %v594 = vld [vmem:[#allocation4 + $0x10] sm:$0xff]
      %598 = vrot.lane.b32.xlu0 %v592, 15
      %v599 = vpop.permute.xlu0 %598
      %600 = vrot.lane.b32.xlu0 %v593, 15
      %v601 = vpop.permute.xlu0 %600
      %602 = vrot.lane.b32.xlu0 %v594, 15
      %v603 = vpop.permute.xlu0 %602
      %v604 = vsel %vm326, %v599, %v601
      %v605 = vsel %vm326, %v601, %v603
      %v608 = vsel %vm315, %v604, 0.0
      %v609 = vsel %vm316, %v605, 0.0
      %610 = vst [vmem:[#allocation5 + $0x20] sm:$0xff] %v608
      %611 = vst [vmem:[#allocation5 + $0x28] sm:$0xff] %v609
      %v612 = vld [vmem:[#allocation4] sm:$0xff]
      %v613 = vld [vmem:[#allocation4 + $0x8] sm:$0xff]
      %v614 = vld [vmem:[#allocation4 + $0x10] sm:$0xff]
      %618 = vrot.lane.b32.xlu0 %v612, 1
      %v619 = vpop.permute.xlu0 %618
      %620 = vrot.lane.b32.xlu0 %v613, 1
      %v621 = vpop.permute.xlu0 %620
      %622 = vrot.lane.b32.xlu0 %v614, 1
      %v623 = vpop.permute.xlu0 %622
      %v624 = vsel %vm347, %v619, %v621
      %v625 = vsel %vm347, %v621, %v623
      %v628 = vsel %vm271, %v624, 0.0
      %v629 = vsel %vm272, %v625, 0.0
      %630 = vst [vmem:[#allocation5 + $0x30] sm:$0xff] %v628
      %631 = vst [vmem:[#allocation5 + $0x38] sm:$0xff] %v629
      %v632 = vld [vmem:[#allocation4 + $0x8] sm:$0xff]
      %v633 = vld [vmem:[#allocation4 + $0x10] sm:$0xff]
      %634 = vst [vmem:[#allocation5 + $0x40] sm:$0xff] %v632
      %635 = vst [vmem:[#allocation5 + $0x48] sm:$0xff] %v633
      %v636 = vld [vmem:[#allocation4 + $0x8] sm:$0xff]
      %v637 = vld [vmem:[#allocation4 + $0x10] sm:$0xff]
      %v638 = vld [vmem:[#allocation4 + $0x18] sm:$0xff]
      %642 = vrot.lane.b32.xlu0 %v636, 127
      %v643 = vpop.permute.xlu0 %642
      %644 = vrot.lane.b32.xlu0 %v637, 127
      %v645 = vpop.permute.xlu0 %644
      %646 = vrot.lane.b32.xlu0 %v638, 127
      %v647 = vpop.permute.xlu0 %646
      %v648 = vsel %vm372, %v643, %v645
      %v649 = vsel %vm372, %v645, %v647
      %v652 = vsel %vm315, %v648, 0.0
      %v653 = vsel %vm316, %v649, 0.0
      %654 = vst [vmem:[#allocation5 + $0x50] sm:$0xff] %v652
      %655 = vst [vmem:[#allocation5 + $0x58] sm:$0xff] %v653
      %v656 = vld [vmem:[#allocation4 + $0x8] sm:$0xff]
      %v657 = vld [vmem:[#allocation4 + $0x10] sm:$0xff]
      %v658 = vld [vmem:[#allocation4 + $0x18] sm:$0xff]
      %662 = vrot.lane.b32.xlu0 %v656, 113
      %v663 = vpop.permute.xlu0 %662
      %664 = vrot.lane.b32.xlu0 %v657, 113
      %v665 = vpop.permute.xlu0 %664
      %666 = vrot.lane.b32.xlu0 %v658, 113
      %v667 = vpop.permute.xlu0 %666
      %v668 = vsel %vm393, %v663, %v665
      %v669 = vsel %vm393, %v665, %v667
      %v672 = vsel %vm271, %v668, 0.0
      %v673 = vsel %vm272, %v669, 0.0
      %674 = vst [vmem:[#allocation5 + $0x60] sm:$0xff] %v672
      %675 = vst [vmem:[#allocation5 + $0x68] sm:$0xff] %v673
      %v676 = vld [vmem:[#allocation4 + $0x8] sm:$0xff]
      %v677 = vld [vmem:[#allocation4 + $0x10] sm:$0xff]
      %v678 = vld [vmem:[#allocation4 + $0x18] sm:$0xff]
      %682 = vrot.lane.b32.xlu0 %v676, 112
      %v683 = vpop.permute.xlu0 %682
      %684 = vrot.lane.b32.xlu0 %v677, 112
      %v685 = vpop.permute.xlu0 %684
      %686 = vrot.lane.b32.xlu0 %v678, 112
      %v687 = vpop.permute.xlu0 %686
      %v688 = vsel %vm414, %v683, %v685
      %v689 = vsel %vm414, %v685, %v687
      %692 = vst [vmem:[#allocation5 + $0x70] sm:$0xff] %v688
      %693 = vst [vmem:[#allocation5 + $0x78] sm:$0xff] %v689
      %v694 = vld [vmem:[#allocation4 + $0x8] sm:$0xff]
      %v695 = vld [vmem:[#allocation4 + $0x10] sm:$0xff]
      %v696 = vld [vmem:[#allocation4 + $0x18] sm:$0xff]
      %700 = vrot.lane.b32.xlu0 %v694, 111
      %v701 = vpop.permute.xlu0 %700
      %702 = vrot.lane.b32.xlu0 %v695, 111
      %v703 = vpop.permute.xlu0 %702
      %704 = vrot.lane.b32.xlu0 %v696, 111
      %v705 = vpop.permute.xlu0 %704
      %v706 = vsel %vm433, %v701, %v703
      %v707 = vsel %vm433, %v703, %v705
      %v710 = vsel %vm315, %v706, 0.0
      %v711 = vsel %vm316, %v707, 0.0
      %712 = vst [vmem:[#allocation5 + $0x80] sm:$0xff] %v710
      %713 = vst [vmem:[#allocation5 + $0x88] sm:$0xff] %v711
      %v714 = vld [vmem:[%s2] sm:$0xf]
      %v715 = vld [vmem:[#allocation5] sm:$0xff]
      %v716 = vld [vmem:[#allocation5 + $0x8] sm:$0xff]
      %v717 = vld [vmem:[#allocation5 + $0x10] sm:$0xff]
      %v718 = vld [vmem:[#allocation5 + $0x18] sm:$0xff]
      %v719 = vld [vmem:[#allocation5 + $0x20] sm:$0xff]
      %v720 = vld [vmem:[#allocation5 + $0x28] sm:$0xff]
      %v721 = vld [vmem:[#allocation5 + $0x30] sm:$0xff]
      %v722 = vld [vmem:[#allocation5 + $0x38] sm:$0xff]
      %v723 = vld [vmem:[#allocation5 + $0x40] sm:$0xff]
      %v724 = vld [vmem:[#allocation5 + $0x48] sm:$0xff]
      %v725 = vld [vmem:[#allocation5 + $0x50] sm:$0xff]
      %v726 = vld [vmem:[#allocation5 + $0x58] sm:$0xff]
      %v727 = vld [vmem:[#allocation5 + $0x60] sm:$0xff]
      %v728 = vld [vmem:[#allocation5 + $0x68] sm:$0xff]
      %v729 = vld [vmem:[#allocation5 + $0x70] sm:$0xff]
      %v730 = vld [vmem:[#allocation5 + $0x78] sm:$0xff]
      %v731 = vld [vmem:[#allocation5 + $0x80] sm:$0xff]
      %v732 = vld [vmem:[#allocation5 + $0x88] sm:$0xff]
      %v733 = vld [vmem:[%s4] sm:$0xf]
      %735 = vset.pattern.permute.xlu0 0
      %736 = vperm.xlu0 %735, %v733
      %v737 = vpop.permute.xlu0 %736
      %v740 = vsel %vm467, %v714, 0
      %742 = vmatprep.subr.mxu0 %v716
      %743 = vmatpush1.msra.mxu0 %v715
      %744 = vmatprep.subr.mxu0 %v718
      %745 = vmatpush1.msra.mxu0 %v717
      %746 = vmatprep.subr.mxu0 %v720
      %747 = vmatpush1.msra.mxu0 %v719
      %748 = vmatprep.subr.mxu0 %v722
      %749 = vmatpush1.msra.mxu0 %v721
      %750 = vmatprep.subr.mxu0 %v724
      %751 = vmatpush1.msra.mxu0 %v723
      %752 = vmatprep.subr.mxu0 %v726
      %753 = vmatpush1.msra.mxu0 %v725
      %754 = vmatprep.subr.mxu0 %v728
      %755 = vmatpush1.msra.mxu0 %v727
      %756 = vmatprep.subr.mxu0 %v730
      %757 = vmatpush1.msra.mxu0 %v729
      %758 = vmatprep.subr.mxu0 %v732
      %759 = vmatpush1.msra.mxu0 %v731
      %760 = vmatprep.subr.mxu0 0.0
      %761 = vmatpush1.msra.mxu0 0.0
      %762 = vmatprep.subr.mxu0 0.0
      %763 = vmatpush1.msra.mxu0 0.0
      %764 = vmatprep.subr.mxu0 0.0
      %765 = vmatpush1.msra.mxu0 0.0
      %766 = vmatprep.subr.mxu0 0.0
      %767 = vmatpush1.msra.mxu0 0.0
      %768 = vmatprep.subr.mxu0 0.0
      %769 = vmatpush1.msra.mxu0 0.0
      %770 = vmatprep.subr.mxu0 0.0
      %771 = vmatpush1.msra.mxu0 0.0
      %772 = vmatprep.subr.mxu0 0.0
      %773 = vmatpush1.msra.mxu0 0.0
      %774 = vmatprep.subr.mxu0 0.0
      %775 = vmatpush1.msra.mxu0 0.0
      %776 = vmatprep.subr.mxu0 0.0
      %777 = vmatpush1.msra.mxu0 0.0
      %778 = vmatprep.subr.mxu0 0.0
      %779 = vmatpush1.msra.mxu0 0.0
      %780 = vmatprep.subr.mxu0 0.0
      %781 = vmatpush1.msra.mxu0 0.0
      %782 = vmatprep.subr.mxu0 0.0
      %783 = vmatpush1.msra.mxu0 0.0
      %784 = vmatprep.subr.mxu0 0.0
      %785 = vmatpush1.msra.mxu0 0.0
      %786 = vmatprep.subr.mxu0 0.0
      %787 = vmatpush1.msra.mxu0 0.0
      %788 = vmatprep.subr.mxu0 0.0
      %789 = vmatpush1.msra.mxu0 0.0
      %790 = vmatprep.subr.mxu0 0.0
      %791 = vmatpush1.msra.mxu0 0.0
      %792 = vmatprep.subr.mxu0 0.0
      %793 = vmatpush1.msra.mxu0 0.0
      %794 = vmatprep.subr.mxu0 0.0
      %795 = vmatpush1.msra.mxu0 0.0
      %796 = vmatprep.subr.mxu0 0.0
      %797 = vmatpush1.msra.mxu0 0.0
      %798 = vmatprep.subr.mxu0 0.0
      %799 = vmatpush1.msra.mxu0 0.0
      %800 = vmatprep.subr.mxu0 0.0
      %801 = vmatpush1.msra.mxu0 0.0
      %802 = vmatprep.subr.mxu0 0.0
      %803 = vmatpush1.msra.mxu0 0.0
      %804 = vmatprep.subr.mxu0 0.0
      %805 = vmatpush1.msra.mxu0 0.0
      %806 = vmatprep.mubr.f32.mxu0 0.0
      %807 = vmatmul.mubr.f32.gmra.mrb[0].mxu0 %v740
      %v808 = vpop.f32.mrb[0].mxu0
      %v809 = vadd.f32 %v737, %v808
      %v810 = vpop.f32.mrb[0].mxu0
      %v811 = vadd.f32 %v737, %v810
      %812 = vdwg.mxu0
      %v813 = vadd.f32 %v809, %v256
      %v814 = vadd.f32 %v811, %v262
      %vm815 = vcmp.gt.f32.partialorder %v813, 0.0
      %vm816 = vcmp.gt.f32.partialorder %v814, 0.0
      %v817 = vmul.f32 %v813, 0.2
      %v818 = vmul.f32 %v814, 0.2
      %v819 = vsel %vm815, %v813, %v817
      %v820 = vsel %vm816, %v814, %v818
      %v823 = vcombine.low %v819, %v820
      %825 = vst [vmem:[%s224] sm:$0xff] %v823
      %p826 = scmp.lt.s32.totalorder %s16, 1
      %s827 = scalar_select %p826, %s16, 1
      %s828 = smul.addr %s827, 2
      %s829 = smul.addr %s828, 4
      %s830 = scalar_lea.vmem %s5, %s829
      // Predicated region
      $region41: #{res_block_forward.1} parent=39 // pred_check
        %p831 = pneg %p144
      $region42: #{res_block_forward.1} parent=39 // pred_check_branch
        %833 = sbr.rel (%p831) target = $region44
      $region43: #{res_block_forward.1} parent=39 // pred_region
        _
      $region44: #{res_block_forward.1} parent=39 // pred_fallthru
        _
    $region40: #{res_block_forward.1} parent=5 // pred_fallthru
      _
    %p834 = scmp.le.s32.totalorder 2, %s11
    // Predicated region
    $region45: #{res_block_forward.1} parent=5 // pred_check
      %p835 = pneg %p834
    $region46: #{res_block_forward.1} parent=5 // pred_check_branch
      %837 = sbr.rel (%p835) target = $region48
    $region47: #{res_block_forward.1} parent=5 // pred_region
      %s838 = ssub.s32 %s11, 2
      // Predicated region
      $region49: #{res_block_forward.1} parent=47 // pred_check
        %p839 = pneg %p150
      $region50: #{res_block_forward.1} parent=47 // pred_check_branch
        %841 = sbr.rel (%p839) target = $region52
      $region51: #{res_block_forward.1} parent=47 // pred_region
        %p842 = scmp.lt.s32.totalorder %s17, 1
        %s843 = scalar_select %p842, %s17, 1
        %s844 = smul.addr %s843, 2
        %s845 = smul.addr %s844, 4
        %s846 = scalar_lea.vmem %s5, %s845
      $region52: #{res_block_forward.1} parent=47 // pred_fallthru
        _
    $region48: #{res_block_forward.1} parent=5 // pred_fallthru
      _
  $region6: #{res_block_forward.1} parent=0 // loop_footer
    %s15 = sadd.s32 1, %s11
  $region7: #{res_block_forward.1} parent=0 // loop_footer_branch
    %10 = sbr.rel target = $region3
  $region8: #{res_block_forward.1} parent=0 // loop_exit
    _

</llo_original>
